<compile_context>
chip_gen: v7x
topology: tpu7x:2x2x1
jax: 0.10.0
libtpu: 0.0.40
codegen_flags: <defaults>
</compile_context>

<pallas_src>
import math
from functools import partial

import jax
import jax.numpy as jnp
from jax import lax
from jax.experimental import pallas as pl
from jax.experimental.pallas import tpu as pltpu


def fused_mha_kernel(x_ref, w_qkv_ref, out_ref, *, num_heads, head_dim):
    # x_ref: (T, E) bf16 ; w_qkv_ref: (E, 3*H*D) bf16 ; out_ref: (T, H*D) f32
    T = x_ref.shape[0]
    HD = num_heads * head_dim

    x = x_ref[...]
    w = w_qkv_ref[...]

    # One wide MXU matmul for every head's Q, K and V (f32 accumulation).
    # 1/sqrt(D) is already folded into the Q columns of the weight slab.
    qkv = jnp.dot(x, w, preferred_element_type=jnp.float32)        # (T, 3*H*D) f32
    qkv_bf = qkv.astype(jnp.bfloat16)

    q = qkv_bf[:, 0:HD]
    k = qkv_bf[:, HD:2 * HD]
    v = qkv_bf[:, 2 * HD:3 * HD]

    # Causal mask built once in-kernel (2-D iota; no bias input / extra DMA).
    row = lax.broadcasted_iota(jnp.int32, (T, T), 0)
    col = lax.broadcasted_iota(jnp.int32, (T, T), 1)
    causal = col > row                                              # True above diag

    ctxs = []
    for h in range(num_heads):          # static Python loop, fully unrolled (H=4)
        lo, hi = h * head_dim, (h + 1) * head_dim
        q_h, k_h, v_h = q[:, lo:hi], k[:, lo:hi], v[:, lo:hi]

        # Scores: q @ k^T without materializing a transpose (NT dot, f32 accum).
        s = lax.dot_general(q_h, k_h,
                            dimension_numbers=(((1,), (1,)), ((), ())),
                            preferred_element_type=jnp.float32)     # (T, T) f32
        s = jnp.where(causal, -1e30, s)

        # Numerically-stable softmax over keys (f32); reciprocal on the EUP slot.
        m = jnp.max(s, axis=-1, keepdims=True)
        p = jnp.exp(s - m)
        p = p * pl.reciprocal(jnp.sum(p, axis=-1, keepdims=True), approx=True)

        # Context: attention weights @ values (dropout is identity in eval mode).
        ctxs.append(jnp.dot(p.astype(jnp.bfloat16), v_h,
                            preferred_element_type=jnp.float32))    # (T, D) f32

    # Single lane-dense (T, H*D) store == torch.cat([head_0, ..., head_{H-1}], -1).
    out_ref[...] = jnp.concatenate(ctxs, axis=-1).astype(out_ref.dtype)


def multi_head_attention_wrapper(x, wq, wk, wv):
    """x: (B, T, E) f32.  wq/wk/wv: (H, E, D) f32, already in `x @ W` orientation
    (i.e. the transpose of the torch nn.Linear (D, E) weight).  Returns (B, T, H*D)."""
    B, T, E = x.shape
    H, E2, D = wq.shape
    assert E2 == E
    inv_sqrt_d = 1.0 / math.sqrt(D)

    def to_slab(w):  # (H, E, D) -> (E, H*D), heads contiguous along the lane axis
        return jnp.transpose(w, (1, 0, 2)).reshape(E, H * D)

    # Fused QKV weight slab, scale folded into the Q columns, cast once to bf16.
    w_qkv = jnp.concatenate(
        [to_slab(wq * inv_sqrt_d), to_slab(wk), to_slab(wv)], axis=-1
    ).astype(jnp.bfloat16)                                          # (E, 3*H*D)

    x_bf = x.astype(jnp.bfloat16)

    return pl.pallas_call(
        partial(fused_mha_kernel, num_heads=H, head_dim=D),
        out_shape=jax.ShapeDtypeStruct((B, T, H * D), x.dtype),
        grid_spec=pltpu.PrefetchScalarGridSpec(
            num_scalar_prefetch=0,
            grid=(B,),
            in_specs=[
                pl.BlockSpec((pl.Squeezed(), T, E), lambda b: (b, 0, 0)),  # x per batch
                pl.BlockSpec((E, 3 * H * D), lambda b: (0, 0)),            # fused W_qkv
            ],
            out_specs=pl.BlockSpec((pl.Squeezed(), T, H * D),
                                   lambda b: (b, 0, 0)),
        ),
        compiler_params=pltpu.CompilerParams(
            dimension_semantics=("parallel",),
        ),
    )(x_bf, w_qkv)


def reference_mha_wrapper(x, wq, wk, wv):
    """Pure-JAX f32 reference mirroring the PyTorch forward (eval mode)."""
    B, T, E = x.shape
    H, _, D = wq.shape
    mask = jnp.triu(jnp.ones((T, T), dtype=bool), k=1)
    outs = []
    for h in range(H):
        q = x @ wq[h]
        k = x @ wk[h]
        v = x @ wv[h]
        s = jnp.einsum("btd,bsd->bts", q, k)
        s = jnp.where(mask, -jnp.inf, s)
        a = jax.nn.softmax(s / math.sqrt(D), axis=-1)
        outs.append(jnp.einsum("bts,bsd->btd", a, v))
    return jnp.concatenate(outs, axis=-1)


if __name__ == "__main__":
    # Small config consistent with the module:
    #   input_embedding_dim=32, output_embedding_dim=16, context_length=8,
    #   num_heads=4, dropout=0.0, qkv_bias=False, batch=2
    B, T, E, D, H = 2, 8, 32, 16, 4

    key = jax.random.PRNGKey(0)
    kx, kq, kk, kv = jax.random.split(key, 4)
    x = jax.random.normal(kx, (B, T, E), jnp.float32)

    # Per-head nn.Linear weights in torch (out, in) = (D, E) convention...
    wq_torch = 0.05 * jax.random.normal(kq, (H, D, E), jnp.float32)
    wk_torch = 0.05 * jax.random.normal(kk, (H, D, E), jnp.float32)
    wv_torch = 0.05 * jax.random.normal(kv, (H, D, E), jnp.float32)
    # ...pre-transposed ONCE on the host to (H, E, D) so the kernel never transposes.
    wq = jnp.transpose(wq_torch, (0, 2, 1))
    wk = jnp.transpose(wk_torch, (0, 2, 1))
    wv = jnp.transpose(wv_torch, (0, 2, 1))

    out = multi_head_attention_wrapper(x, wq, wk, wv)
    out = jax.block_until_ready(out)

    ref = reference_mha_wrapper(x, wq, wk, wv)
    assert out.shape == (B, T, H * D)
    # bf16 matmul operands + approx reciprocal -> compare against f32 reference loosely.
    assert jnp.allclose(out, ref, atol=2e-2, rtol=2e-2), "mismatch vs JAX reference"

    print("KERNEL_OK")
</pallas_src>

<mosaic_0001>
module attributes {stable_mosaic.version = 11 : i64} {
  func.func @fused_mha_kernel(%arg0: i32, %arg1: memref<1x8x32xbf16, #tpu.memory_space<vmem>>, %arg2: memref<32x192xbf16, #tpu.memory_space<vmem>>, %arg3: memref<1x8x64xf32, #tpu.memory_space<vmem>>) attributes {dimension_semantics = [#tpu.dimension_semantics<parallel>], iteration_bounds = array<i64: 2>, scalar_prefetch = 0 : i64, scratch_operands = 0 : i64, tpu.core_type = #tpu.core_type<tc>, window_params = [{transform_indices = @transform_0, window_bounds = array<i64: 1, 8, 32>}, {pipeline_mode = #tpu.pipeline_mode<synchronous>, transform_indices = @transform_1, window_bounds = array<i64: 32, 192>}, {transform_indices = @transform_2, window_bounds = array<i64: 1, 8, 64>}]} {
    %c0 = arith.constant 0 : index
    %c0_0 = arith.constant 0 : index
    %c0_1 = arith.constant 0 : index
    %0 = vector.load %arg1[%c0, %c0_0, %c0_1] : memref<1x8x32xbf16, #tpu.memory_space<vmem>>, vector<1x8x32xbf16>
    %1 = vector.shape_cast %0 : vector<1x8x32xbf16> to vector<8x32xbf16>
    %c0_2 = arith.constant 0 : index
    %c0_3 = arith.constant 0 : index
    %2 = vector.load %arg2[%c0_2, %c0_3] : memref<32x192xbf16, #tpu.memory_space<vmem>>, vector<32x192xbf16>
    %cst = arith.constant dense<0.000000e+00> : vector<8x192xf32>
    %3 = tpu.matmul %1, %2, %cst {dimension_numbers = #tpu.dot_dimension_numbers<[1], [0], [0], [1], [0, 0, 1, 1], [], []>} : vector<8x32xbf16>, vector<32x192xbf16>, vector<8x192xf32> -> vector<8x192xf32>
    %4 = arith.truncf %3 : vector<8x192xf32> to vector<8x192xbf16>
    %5 = vector.extract_strided_slice %4 {offsets = [0, 0], sizes = [8, 64], strides = [1, 1]} : vector<8x192xbf16> to vector<8x64xbf16>
    %6 = vector.extract_strided_slice %4 {offsets = [0, 64], sizes = [8, 64], strides = [1, 1]} : vector<8x192xbf16> to vector<8x64xbf16>
    %7 = vector.extract_strided_slice %4 {offsets = [0, 128], sizes = [8, 64], strides = [1, 1]} : vector<8x192xbf16> to vector<8x64xbf16>
    %8 = tpu.iota {dimensions = array<i32: 0>} : vector<8x8xi32>
    %9 = tpu.iota {dimensions = array<i32: 1>} : vector<8x8xi32>
    %10 = arith.cmpi sgt, %9, %8 : vector<8x8xi32>
    %11 = vector.extract_strided_slice %5 {offsets = [0, 0], sizes = [8, 16], strides = [1, 1]} : vector<8x64xbf16> to vector<8x16xbf16>
    %12 = vector.extract_strided_slice %6 {offsets = [0, 0], sizes = [8, 16], strides = [1, 1]} : vector<8x64xbf16> to vector<8x16xbf16>
    %13 = vector.extract_strided_slice %7 {offsets = [0, 0], sizes = [8, 16], strides = [1, 1]} : vector<8x64xbf16> to vector<8x16xbf16>
    %cst_4 = arith.constant dense<0.000000e+00> : vector<8x8xf32>
    %14 = tpu.matmul %11, %12, %cst_4 {dimension_numbers = #tpu.dot_dimension_numbers<[1], [1], [0], [0], [0, 0, 1, 0], [], []>} : vector<8x16xbf16>, vector<8x16xbf16>, vector<8x8xf32> -> vector<8x8xf32>
    %cst_5 = arith.constant -1.000000e+30 : f32
    %15 = vector.broadcast %cst_5 : f32 to vector<8x8xf32>
    %16 = arith.select %10, %15, %14 : vector<8x8xi1>, vector<8x8xf32>
    %cst_6 = arith.constant dense<0xFF800000> : vector<8xf32>
    %17 = vector.multi_reduction <maximumf>, %16, %cst_6 [1] : vector<8x8xf32> to vector<8xf32>
    %18 = vector.shape_cast %17 : vector<8xf32> to vector<8x1xf32>
    %19 = vector.broadcast %18 : vector<8x1xf32> to vector<8x8xf32>
    %20 = arith.subf %16, %19 : vector<8x8xf32>
    %21 = math.exp %20 : vector<8x8xf32>
    %cst_7 = arith.constant dense<0.000000e+00> : vector<8xf32>
    %22 = vector.multi_reduction <add>, %21, %cst_7 [1] : vector<8x8xf32> to vector<8xf32>
    %23 = vector.shape_cast %22 : vector<8xf32> to vector<8x1xf32>
    %24 = tpu.reciprocal %23 {approx = true} : vector<8x1xf32> -> vector<8x1xf32>
    %25 = vector.broadcast %24 : vector<8x1xf32> to vector<8x8xf32>
    %26 = arith.mulf %21, %25 : vector<8x8xf32>
    %27 = arith.truncf %26 : vector<8x8xf32> to vector<8x8xbf16>
    %cst_8 = arith.constant dense<0.000000e+00> : vector<8x16xf32>
    %28 = tpu.matmul %27, %13, %cst_8 {dimension_numbers = #tpu.dot_dimension_numbers<[1], [0], [0], [1], [0, 0, 1, 1], [], []>} : vector<8x8xbf16>, vector<8x16xbf16>, vector<8x16xf32> -> vector<8x16xf32>
    %29 = vector.extract_strided_slice %5 {offsets = [0, 16], sizes = [8, 16], strides = [1, 1]} : vector<8x64xbf16> to vector<8x16xbf16>
    %30 = vector.extract_strided_slice %6 {offsets = [0, 16], sizes = [8, 16], strides = [1, 1]} : vector<8x64xbf16> to vector<8x16xbf16>
    %31 = vector.extract_strided_slice %7 {offsets = [0, 16], sizes = [8, 16], strides = [1, 1]} : vector<8x64xbf16> to vector<8x16xbf16>
    %cst_9 = arith.constant dense<0.000000e+00> : vector<8x8xf32>
    %32 = tpu.matmul %29, %30, %cst_9 {dimension_numbers = #tpu.dot_dimension_numbers<[1], [1], [0], [0], [0, 0, 1, 0], [], []>} : vector<8x16xbf16>, vector<8x16xbf16>, vector<8x8xf32> -> vector<8x8xf32>
    %cst_10 = arith.constant -1.000000e+30 : f32
    %33 = vector.broadcast %cst_10 : f32 to vector<8x8xf32>
    %34 = arith.select %10, %33, %32 : vector<8x8xi1>, vector<8x8xf32>
    %cst_11 = arith.constant dense<0xFF800000> : vector<8xf32>
    %35 = vector.multi_reduction <maximumf>, %34, %cst_11 [1] : vector<8x8xf32> to vector<8xf32>
    %36 = vector.shape_cast %35 : vector<8xf32> to vector<8x1xf32>
    %37 = vector.broadcast %36 : vector<8x1xf32> to vector<8x8xf32>
    %38 = arith.subf %34, %37 : vector<8x8xf32>
    %39 = math.exp %38 : vector<8x8xf32>
    %cst_12 = arith.constant dense<0.000000e+00> : vector<8xf32>
    %40 = vector.multi_reduction <add>, %39, %cst_12 [1] : vector<8x8xf32> to vector<8xf32>
    %41 = vector.shape_cast %40 : vector<8xf32> to vector<8x1xf32>
    %42 = tpu.reciprocal %41 {approx = true} : vector<8x1xf32> -> vector<8x1xf32>
    %43 = vector.broadcast %42 : vector<8x1xf32> to vector<8x8xf32>
    %44 = arith.mulf %39, %43 : vector<8x8xf32>
    %45 = arith.truncf %44 : vector<8x8xf32> to vector<8x8xbf16>
    %cst_13 = arith.constant dense<0.000000e+00> : vector<8x16xf32>
    %46 = tpu.matmul %45, %31, %cst_13 {dimension_numbers = #tpu.dot_dimension_numbers<[1], [0], [0], [1], [0, 0, 1, 1], [], []>} : vector<8x8xbf16>, vector<8x16xbf16>, vector<8x16xf32> -> vector<8x16xf32>
    %47 = vector.extract_strided_slice %5 {offsets = [0, 32], sizes = [8, 16], strides = [1, 1]} : vector<8x64xbf16> to vector<8x16xbf16>
    %48 = vector.extract_strided_slice %6 {offsets = [0, 32], sizes = [8, 16], strides = [1, 1]} : vector<8x64xbf16> to vector<8x16xbf16>
    %49 = vector.extract_strided_slice %7 {offsets = [0, 32], sizes = [8, 16], strides = [1, 1]} : vector<8x64xbf16> to vector<8x16xbf16>
    %cst_14 = arith.constant dense<0.000000e+00> : vector<8x8xf32>
    %50 = tpu.matmul %47, %48, %cst_14 {dimension_numbers = #tpu.dot_dimension_numbers<[1], [1], [0], [0], [0, 0, 1, 0], [], []>} : vector<8x16xbf16>, vector<8x16xbf16>, vector<8x8xf32> -> vector<8x8xf32>
    %cst_15 = arith.constant -1.000000e+30 : f32
    %51 = vector.broadcast %cst_15 : f32 to vector<8x8xf32>
    %52 = arith.select %10, %51, %50 : vector<8x8xi1>, vector<8x8xf32>
    %cst_16 = arith.constant dense<0xFF800000> : vector<8xf32>
    %53 = vector.multi_reduction <maximumf>, %52, %cst_16 [1] : vector<8x8xf32> to vector<8xf32>
    %54 = vector.shape_cast %53 : vector<8xf32> to vector<8x1xf32>
    %55 = vector.broadcast %54 : vector<8x1xf32> to vector<8x8xf32>
    %56 = arith.subf %52, %55 : vector<8x8xf32>
    %57 = math.exp %56 : vector<8x8xf32>
    %cst_17 = arith.constant dense<0.000000e+00> : vector<8xf32>
    %58 = vector.multi_reduction <add>, %57, %cst_17 [1] : vector<8x8xf32> to vector<8xf32>
    %59 = vector.shape_cast %58 : vector<8xf32> to vector<8x1xf32>
    %60 = tpu.reciprocal %59 {approx = true} : vector<8x1xf32> -> vector<8x1xf32>
    %61 = vector.broadcast %60 : vector<8x1xf32> to vector<8x8xf32>
    %62 = arith.mulf %57, %61 : vector<8x8xf32>
    %63 = arith.truncf %62 : vector<8x8xf32> to vector<8x8xbf16>
    %cst_18 = arith.constant dense<0.000000e+00> : vector<8x16xf32>
    %64 = tpu.matmul %63, %49, %cst_18 {dimension_numbers = #tpu.dot_dimension_numbers<[1], [0], [0], [1], [0, 0, 1, 1], [], []>} : vector<8x8xbf16>, vector<8x16xbf16>, vector<8x16xf32> -> vector<8x16xf32>
    %65 = vector.extract_strided_slice %5 {offsets = [0, 48], sizes = [8, 16], strides = [1, 1]} : vector<8x64xbf16> to vector<8x16xbf16>
    %66 = vector.extract_strided_slice %6 {offsets = [0, 48], sizes = [8, 16], strides = [1, 1]} : vector<8x64xbf16> to vector<8x16xbf16>
    %67 = vector.extract_strided_slice %7 {offsets = [0, 48], sizes = [8, 16], strides = [1, 1]} : vector<8x64xbf16> to vector<8x16xbf16>
    %cst_19 = arith.constant dense<0.000000e+00> : vector<8x8xf32>
    %68 = tpu.matmul %65, %66, %cst_19 {dimension_numbers = #tpu.dot_dimension_numbers<[1], [1], [0], [0], [0, 0, 1, 0], [], []>} : vector<8x16xbf16>, vector<8x16xbf16>, vector<8x8xf32> -> vector<8x8xf32>
    %cst_20 = arith.constant -1.000000e+30 : f32
    %69 = vector.broadcast %cst_20 : f32 to vector<8x8xf32>
    %70 = arith.select %10, %69, %68 : vector<8x8xi1>, vector<8x8xf32>
    %cst_21 = arith.constant dense<0xFF800000> : vector<8xf32>
    %71 = vector.multi_reduction <maximumf>, %70, %cst_21 [1] : vector<8x8xf32> to vector<8xf32>
    %72 = vector.shape_cast %71 : vector<8xf32> to vector<8x1xf32>
    %73 = vector.broadcast %72 : vector<8x1xf32> to vector<8x8xf32>
    %74 = arith.subf %70, %73 : vector<8x8xf32>
    %75 = math.exp %74 : vector<8x8xf32>
    %cst_22 = arith.constant dense<0.000000e+00> : vector<8xf32>
    %76 = vector.multi_reduction <add>, %75, %cst_22 [1] : vector<8x8xf32> to vector<8xf32>
    %77 = vector.shape_cast %76 : vector<8xf32> to vector<8x1xf32>
    %78 = tpu.reciprocal %77 {approx = true} : vector<8x1xf32> -> vector<8x1xf32>
    %79 = vector.broadcast %78 : vector<8x1xf32> to vector<8x8xf32>
    %80 = arith.mulf %75, %79 : vector<8x8xf32>
    %81 = arith.truncf %80 : vector<8x8xf32> to vector<8x8xbf16>
    %cst_23 = arith.constant dense<0.000000e+00> : vector<8x16xf32>
    %82 = tpu.matmul %81, %67, %cst_23 {dimension_numbers = #tpu.dot_dimension_numbers<[1], [0], [0], [1], [0, 0, 1, 1], [], []>} : vector<8x8xbf16>, vector<8x16xbf16>, vector<8x16xf32> -> vector<8x16xf32>
    %83 = tpu.concatenate %28, %46, %64, %82 in 1 : vector<8x16xf32>, vector<8x16xf32>, vector<8x16xf32>, vector<8x16xf32> -> vector<8x64xf32>
    %c0_24 = arith.constant 0 : index
    %c0_25 = arith.constant 0 : index
    %c0_26 = arith.constant 0 : index
    %84 = vector.load %arg3[%c0_24, %c0_25, %c0_26] : memref<1x8x64xf32, #tpu.memory_space<vmem>>, vector<1x8x64xf32>
    %85 = vector.shape_cast %84 : vector<1x8x64xf32> to vector<8x64xf32>
    %86 = vector.shape_cast %83 : vector<8x64xf32> to vector<1x8x64xf32>
    tpu.vector_store %arg3[%c0_24, %c0_25, %c0_26], %86 {strides = array<i32>} : memref<1x8x64xf32, #tpu.memory_space<vmem>>, vector<1x8x64xf32>,
    return
  }
  func.func @transform_0(%arg0: i32) -> (i32, i32, i32) {
    %c0_i32 = arith.constant 0 : i32
    %c0_i32_0 = arith.constant 0 : i32
    %c0_i32_1 = arith.constant 0 : i32
    return %arg0, %c0_i32, %c0_i32_0 : i32, i32, i32
  }
  func.func @transform_1(%arg0: i32) -> (i32, i32) {
    %c0_i32 = arith.constant 0 : i32
    %c0_i32_0 = arith.constant 0 : i32
    %c0_i32_1 = arith.constant 0 : i32
    return %c0_i32, %c0_i32_0 : i32, i32
  }
  func.func @transform_2(%arg0: i32) -> (i32, i32, i32) {
    %c0_i32 = arith.constant 0 : i32
    %c0_i32_0 = arith.constant 0 : i32
    %c0_i32_1 = arith.constant 0 : i32
    return %arg0, %c0_i32, %c0_i32_0 : i32, i32, i32
  }
}

</mosaic_0001>

<llo_original>
// kernel: tpu_custom_call.1
$region0: #{tpu_custom_call.1}
  #allocation0 [shape = 'u32[]', space=smem, size = 0x4, offset = 0x4, fixed_abs, tag = 'smem constant byte address 0x4 - core index']
  #allocation1 [shape = 'u32[144,128]{1,0:T(1,128)}', space=vmem, size = 0x12000, scoped, tag = 'internal scratch']
  %s0 = inlined_call_operand.hbm [shape: bf16[2,8,32], index: 0, kind: input, shape index: {}]
  %s1 = inlined_call_operand.hbm [shape: bf16[32,192], index: 1, kind: input, shape index: {}]
  %s2 = inlined_call_operand.hbm [shape: f32[2,8,64], index: 2, kind: output, shape index: {}]
  %s3 = sld [smem:[#allocation0]]
  $region49: #{tpu_custom_call.1} parent=0
    _
  %s5 = ssub.s32 1, %s3
  %s6 = scalar_select 0, %s5, %s3
  $region1: #{tpu_custom_call.1} parent=0
    #allocation2 [shape = 'u8[4096]{0}', space=vmem, size = 0x1000, scoped, tag = 'input window, operand 0']
    #allocation3 [shape = 's32[2]{0}', space=sflag, size = 0x8, scoped, tag = 'scoped memory for tpu_custom_call.1']
    #allocation4 [shape = 's32[2]{0}', space=sflag, size = 0x8, scoped, tag = 'scoped memory for tpu_custom_call.1']
    #allocation5 [shape = 'u8[16384]{0}', space=vmem, size = 0x4000, scoped, tag = 'input window, operand 1, single buffered']
    #allocation6 [shape = 's32[1]{0}', space=sflag, size = 0x4, scoped, tag = 'scoped memory for tpu_custom_call.1']
    #allocation7 [shape = 'u8[8192]{0}', space=vmem, size = 0x2000, scoped, tag = 'output window, operand 0']
    %7 = vsyncpa [#allocation3], 0
    %s8 = scalar_lea.sflag [#allocation3], 1
    %9 = vsyncpa %s8, 0
    %10 = vsyncpa [#allocation6], 0
    %11 = vsyncpa [#allocation4], 0
    %s12 = scalar_lea.sflag [#allocation4], 1
    %13 = vsyncpa %s12, 0
    loop: start=0, step=1, limit=4
    $region2: #{tpu_custom_call.1} parent=1 // loop_pre_header
      _
    $region3: #{tpu_custom_call.1} parent=1 // loop_header
      %s15 = sphi 0, %s19
      %p16 = scmp.ge.s32.totalorder %s15, 4
      %s25 = sphi 0, %s27
      %s28 = sphi 0, %s25
      %s29 = sphi 0, %s28
      %s45 = sphi 0, %s29
      %s49 = sphi 0, %s49
      %s51 = sphi 0, %s49
      %s52 = sphi 0, %s51
      %s66 = sphi 0, %s52
      %s72 = sphi 0, %s74
      %s75 = sphi 0, %s72
      %s76 = sphi 0, %s75
      %s92 = sphi 0, %s76
    $region4: #{tpu_custom_call.1} parent=1 // loop_header_branch
      %18 = sbr.rel (%p16) target = $region8
    $region5: #{tpu_custom_call.1} parent=1 // loop_body
      %s20 = ssub.s32 %s15, 1
      %s21 = ssub.s32 %s15, 2
      %s22 = sadd.s32 %s15, 1
      %s23 = ssub.s32 %s15, %s22
      %p24 = scmp.eq.s32.totalorder %s23, 0
      %s26 = sadd.s32 %s25, 1
      %s27 = scalar_select %p24, %s25, %s26
      %p30 = pneg %p24
      %p31 = scmp.eq.s32.totalorder %s15, 1
      %p32 = por %p30, %p31
      %p33 = scmp.ne.s32.totalorder %s25, %s28
      %p34 = scmp.eq.s32.totalorder %s15, 0
      %p35 = por %p33, %p34
      %p36 = scmp.ne.s32.totalorder %s25, %s28
      %p37 = scmp.eq.s32.totalorder %s20, 1
      %p38 = por %p36, %p37
      %p39 = scmp.ne.s32.totalorder %s28, %s29
      %p40 = scmp.eq.s32.totalorder %s20, 0
      %p41 = por %p39, %p40
      %p42 = scmp.ne.s32.totalorder %s28, %s29
      %p43 = scmp.eq.s32.totalorder %s21, 1
      %p44 = por %p42, %p43
      %p46 = scmp.ne.s32.totalorder %s29, %s45
      %p47 = scmp.eq.s32.totalorder %s21, 0
      %p48 = por %p46, %p47
      %s50 = sadd.s32 %s49, 1
      %p53 = scmp.eq.s32.totalorder %s15, 1
      %p54 = scmp.ne.s32.totalorder %s49, %s51
      %p55 = scmp.eq.s32.totalorder %s15, 0
      %p56 = por %p54, %p55
      %p57 = scmp.ne.s32.totalorder %s49, %s51
      %p58 = scmp.eq.s32.totalorder %s20, 1
      %p59 = por %p57, %p58
      %p60 = scmp.ne.s32.totalorder %s51, %s52
      %p61 = scmp.eq.s32.totalorder %s20, 0
      %p62 = por %p60, %p61
      %p63 = scmp.ne.s32.totalorder %s51, %s52
      %p64 = scmp.eq.s32.totalorder %s21, 1
      %p65 = por %p63, %p64
      %p67 = scmp.ne.s32.totalorder %s52, %s66
      %p68 = scmp.eq.s32.totalorder %s21, 0
      %p69 = por %p67, %p68
      %s70 = ssub.s32 %s15, %s22
      %p71 = scmp.eq.s32.totalorder %s70, 0
      %s73 = sadd.s32 %s72, 1
      %s74 = scalar_select %p71, %s72, %s73
      %p77 = pneg %p71
      %p78 = scmp.eq.s32.totalorder %s15, 1
      %p79 = por %p77, %p78
      %p80 = scmp.ne.s32.totalorder %s72, %s75
      %p81 = scmp.eq.s32.totalorder %s15, 0
      %p82 = por %p80, %p81
      %p83 = scmp.ne.s32.totalorder %s72, %s75
      %p84 = scmp.eq.s32.totalorder %s20, 1
      %p85 = por %p83, %p84
      %p86 = scmp.ne.s32.totalorder %s75, %s76
      %p87 = scmp.eq.s32.totalorder %s20, 0
      %p88 = por %p86, %p87
      %p89 = scmp.ne.s32.totalorder %s75, %s76
      %p90 = scmp.eq.s32.totalorder %s21, 1
      %p91 = por %p89, %p90
      %p93 = scmp.ne.s32.totalorder %s76, %s92
      %p94 = scmp.eq.s32.totalorder %s21, 0
      %p95 = por %p93, %p94
      %p96 = scmp.le.s32.totalorder 1, %s15
      %p97 = scmp.lt.s32.totalorder %s15, 3
      %p98 = pnand %p96, %p97
      %p99 = pneg %p98
      // Predicated region
      $region9: #{tpu_custom_call.1} parent=5 // pred_check
        _
      $region10: #{tpu_custom_call.1} parent=5 // pred_check_branch
        %101 = sbr.rel (%p98) target = $region12
      $region11: #{tpu_custom_call.1} parent=5 // pred_region
        %s102 = ssub.s32 %s15, 1
        // Predicated region
        $region13: #{tpu_custom_call.1} parent=11 // pred_check
          %p103 = pneg %p62
        $region14: #{tpu_custom_call.1} parent=11 // pred_check_branch
          %105 = sbr.rel (%p103) target = $region16
        $region15: #{tpu_custom_call.1} parent=11 // pred_region
          %s107 = ssub.s32 512, 512
          %108 = vsyncadd [#allocation6], %s107
          %s109 = sshll.u32 [#allocation5], 4
          %s110 = int_to_ptr.vmem [resolvable:$true] %s109
          %115 = dma.hbm_to_vmem [thread:$0]  %s1, 512, %s110, [#allocation6], 128, 128, 8
        $region16: #{tpu_custom_call.1} parent=11 // pred_fallthru
          _
      $region12: #{tpu_custom_call.1} parent=5 // pred_fallthru
        _
      %p116 = scmp.lt.s32.totalorder %s15, 2
      // Predicated region
      $region17: #{tpu_custom_call.1} parent=5 // pred_check
        %p117 = pneg %p116
      $region18: #{tpu_custom_call.1} parent=5 // pred_check_branch
        %119 = sbr.rel (%p117) target = $region20
      $region19: #{tpu_custom_call.1} parent=5 // pred_region
        // Predicated region
        $region21: #{tpu_custom_call.1} parent=19 // pred_check
          %p120 = pneg %p35
        $region22: #{tpu_custom_call.1} parent=19 // pred_check_branch
          %122 = sbr.rel (%p120) target = $region24
        $region23: #{tpu_custom_call.1} parent=19 // pred_region
          %s123 = sand.u32 %s25, 1
          %s124 = scalar_lea.sflag [#allocation3], %s123
          %s125 = sand.u32 %s25, 1
          %s126 = smul.addr %s125, 4
          %s127 = scalar_lea.vmem [#allocation2], %s126
          %s129 = ssub.s32 64, 64
          %130 = vsyncadd %s124, %s129
          %s131 = smul.addr %s15, 64
          %s132 = scalar_lea.hbm %s0, %s131
          %s134 = sshll.u32 %s127, 4
          %s135 = int_to_ptr.vmem [resolvable:$true] %s134
          %137 = dma.hbm_to_vmem [thread:$0]  %s132, 64, %s135, %s124
        $region24: #{tpu_custom_call.1} parent=19 // pred_fallthru
          _
      $region20: #{tpu_custom_call.1} parent=5 // pred_fallthru
        _
      %p138 = scmp.le.s32.totalorder 1, %s15
      %p139 = scmp.lt.s32.totalorder %s15, 3
      %p140 = pnand %p138, %p139
      %p141 = pneg %p140
      // Predicated region
      $region25: #{tpu_custom_call.1} parent=5 // pred_check
        _
      $region26: #{tpu_custom_call.1} parent=5 // pred_check_branch
        %143 = sbr.rel (%p140) target = $region28
      $region27: #{tpu_custom_call.1} parent=5 // pred_region
        %s144 = ssub.s32 %s15, 1
        %s145 = sand.u32 %s28, 1
        %s146 = scalar_lea.sflag [#allocation3], %s145
        %s147 = sand.u32 %s28, 1
        %s148 = smul.addr %s147, 4
        %s149 = scalar_lea.vmem [#allocation2], %s148
        // Predicated region
        $region29: #{tpu_custom_call.1} parent=27 // pred_check
          %p150 = pneg %p41
        $region30: #{tpu_custom_call.1} parent=27 // pred_check_branch
          %152 = sbr.rel (%p150) target = $region32
        $region31: #{tpu_custom_call.1} parent=27 // pred_region
          %153 = dma.done %s146, 64
        $region32: #{tpu_custom_call.1} parent=27 // pred_fallthru
          _
        // Predicated region
        $region33: #{tpu_custom_call.1} parent=27 // pred_check
          %p154 = pneg %p62
        $region34: #{tpu_custom_call.1} parent=27 // pred_check_branch
          %156 = sbr.rel (%p154) target = $region36
        $region35: #{tpu_custom_call.1} parent=27 // pred_region
          %157 = dma.done [#allocation6], 512
        $region36: #{tpu_custom_call.1} parent=27 // pred_fallthru
          _
        %s158 = sand.u32 %s28, 1
        %s159 = scalar_lea.sflag [#allocation3], %s158
        %s160 = sand.u32 %s28, 1
        %s161 = smul.addr %s160, 4
        %s162 = scalar_lea.vmem [#allocation2], %s161
        %p163 = pneg %p41
        %p164 = pneg %p38
        %p165 = pneg %p62
        %p166 = pneg %p59
        %p167 = pneg %p88
        %p168 = pneg %p85
        %s169 = sand.u32 %s75, 1
        %s170 = scalar_lea.sflag [#allocation4], %s169
        %s171 = sand.u32 %s75, 1
        %s172 = smul.addr %s171, 8
        %s173 = scalar_lea.vmem [#allocation7], %s172
        %v175 = vld [vmem:[%s149] sm:$0xf]
        %v176 = vld [vmem:[#allocation5] sm:$0xff]
        %v177 = vld [vmem:[#allocation5 + $0x8] sm:$0xff]
        %v178 = vld [vmem:[#allocation5 + $0x10] sm:$0xff]
        %v179 = vld [vmem:[#allocation5 + $0x18] sm:$0xff]
        %v184 = vunpack.c.l.b16 %v176
        %v185 = vunpack.c.h.b16 %v176
        %v186 = vunpack.c.l.b16 %v177
        %v187 = vunpack.c.h.b16 %v177
        %v188 = vunpack.c.l.b16 %v178
        %v189 = vunpack.c.h.b16 %v178
        %v190 = vunpack.c.l.b16 %v179
        %v191 = vunpack.c.h.b16 %v179
        %v192 = vpack.c.b16 %v186, %v184
        %v193 = vpack.c.b16 %v187, %v185
        %v194 = vpack.c.b16 %v190, %v188
        %v195 = vpack.c.b16 %v191, %v189
        %vm200 = vcmask 261120
        %v202 = vsel %vm200, %v175, 0
        %204 = vmatprep.subr.bf16.mxu0 %v193
        %205 = vmatpush1.bf16.msra.mxu0 %v192
        %206 = vmatprep.subr.bf16.mxu0 %v195
        %207 = vmatpush1.bf16.msra.mxu0 %v194
        %208 = vmatprep.subr.bf16.mxu0 0
        %209 = vmatpush1.bf16.msra.mxu0 0
        %210 = vmatprep.subr.bf16.mxu0 0
        %211 = vmatpush1.bf16.msra.mxu0 0
        %212 = vmatprep.subr.bf16.mxu0 0
        %213 = vmatpush1.bf16.msra.mxu0 0
        %214 = vmatprep.subr.bf16.mxu0 0
        %215 = vmatpush1.bf16.msra.mxu0 0
        %216 = vmatprep.subr.bf16.mxu0 0
        %217 = vmatpush1.bf16.msra.mxu0 0
        %218 = vmatprep.subr.bf16.mxu0 0
        %219 = vmatpush1.bf16.msra.mxu0 0
        %220 = vmatprep.subr.bf16.mxu0 0
        %221 = vmatpush1.bf16.msra.mxu0 0
        %222 = vmatprep.subr.bf16.mxu0 0
        %223 = vmatpush1.bf16.msra.mxu0 0
        %224 = vmatprep.subr.bf16.mxu0 0
        %225 = vmatpush1.bf16.msra.mxu0 0
        %226 = vmatprep.subr.bf16.mxu0 0
        %227 = vmatpush1.bf16.msra.mxu0 0
        %228 = vmatprep.subr.bf16.mxu0 0
        %229 = vmatpush1.bf16.msra.mxu0 0
        %230 = vmatprep.subr.bf16.mxu0 0
        %231 = vmatpush1.bf16.msra.mxu0 0
        %232 = vmatprep.subr.bf16.mxu0 0
        %233 = vmatpush1.bf16.msra.mxu0 0
        %234 = vmatprep.subr.bf16.mxu0 0
        %235 = vmatpush1.bf16.msra.mxu0 0
        %236 = vmatprep.mubr.bf16.mxu0 0
        %237 = vmatmul.mubr.bf16.gmra.mrb[0].mxu0 %v202
        %v238 = vpop.f32.mrb[0].mxu0
        %v239 = vadd.f32 0.0, %v238
        %v240 = vpop.f32.mrb[0].mxu0
        %v241 = vadd.f32 0.0, %v240
        %v242 = vpop.f32.mrb[0].mxu0
        %v243 = vpop.f32.mrb[0].mxu0
        %244 = vdwg.mxu0
        %v245 = vpack.c.bf16 %v239, %v239
        %v246 = vpack.c.bf16 %v241, %v241
        %v247 = vlaneseq
        %v248 = vshrl.u32 %v247, 7
        %v249 = vlaneseq
        %v250 = vand.u32 %v249, 127
        %vm251 = vcmp.gt.s32.totalorder %v250, %v248
        %253 = vrot.lane.b32.xlu0 %v245, 64
        %v254 = vpop.permute.xlu0 %253
        %vm255 = vcmask 130048
        %v257 = vsel %vm255, %v245, 0
        %v260 = vsel %vm255, %v254, 0
        %262 = vmatprep.subr.bf16.mxu0 0
        %263 = vmatpush1.bf16.xpose.msra.mxu0 %v260
        %264 = vmatprep.subr.bf16.mxu0 0
        %265 = vmatpush1.bf16.xpose.msra.mxu0 0
        %266 = vmatprep.subr.bf16.mxu0 0
        %267 = vmatpush1.bf16.xpose.msra.mxu0 0
        %268 = vmatprep.subr.bf16.mxu0 0
        %269 = vmatpush1.bf16.xpose.msra.mxu0 0
        %270 = vmatprep.subr.bf16.mxu0 0
        %271 = vmatpush1.bf16.xpose.msra.mxu0 0
        %272 = vmatprep.subr.bf16.mxu0 0
        %273 = vmatpush1.bf16.xpose.msra.mxu0 0
        %274 = vmatprep.subr.bf16.mxu0 0
        %275 = vmatpush1.bf16.xpose.msra.mxu0 0
        %276 = vmatprep.subr.bf16.mxu0 0
        %277 = vmatpush1.bf16.xpose.msra.mxu0 0
        %278 = vmatprep.subr.bf16.mxu0 0
        %279 = vmatpush1.bf16.xpose.msra.mxu0 0
        %280 = vmatprep.subr.bf16.mxu0 0
        %281 = vmatpush1.bf16.xpose.msra.mxu0 0
        %282 = vmatprep.subr.bf16.mxu0 0
        %283 = vmatpush1.bf16.xpose.msra.mxu0 0
        %284 = vmatprep.subr.bf16.mxu0 0
        %285 = vmatpush1.bf16.xpose.msra.mxu0 0
        %286 = vmatprep.subr.bf16.mxu0 0
        %287 = vmatpush1.bf16.xpose.msra.mxu0 0
        %288 = vmatprep.subr.bf16.mxu0 0
        %289 = vmatpush1.bf16.xpose.msra.mxu0 0
        %290 = vmatprep.subr.bf16.mxu0 0
        %291 = vmatpush1.bf16.xpose.msra.mxu0 0
        %292 = vmatprep.subr.bf16.mxu0 0
        %293 = vmatpush1.bf16.xpose.msra.mxu0 0
        %294 = vmatprep.mubr.bf16.mxu0 0
        %295 = vmatmul.mubr.bf16.gmra.mrb[0].mxu0 %v257
        %v296 = vpop.f32.mrb[0].mxu0
        %v297 = vadd.f32 0.0, %v296
        %v298 = vpop.f32.mrb[0].mxu0
        %v299 = vpop.f32.mrb[0].mxu0
        %v300 = vpop.f32.mrb[0].mxu0
        %301 = vdwg.mxu0
        %v302 = vsel %vm251, -1e+30, %v297
        %vm303 = vcmask 64512
        %v304 = vsel %vm303, %v302, -inf
        %305 = vmax.xlane.f32.xlu0 %v304
        %v306 = vpop.xlane.xlu0 %305
        %v307 = vsub.f32 %v302, %v306
        %v308 = vmul.f32 %v307, 1.442695
        %v309 = vpow.pop %v308
        %v310 = vsel %vm303, %v309, 0.0
        %311 = vadd.xlane.f32.xlu0 %v310
        %v312 = vpop.xlane.xlu0 %311
        %v313 = vrcp.pop %v312
        %v314 = vmul.f32 %v309, %v313
        %v315 = vpack.c.bf16 %v314, %v314
        %v317 = vsel %vm303, %v315, 0
        %vm319 = vcmask 1043456
        %v321 = vsel %vm319, %v246, 0
        %323 = vmatprep.subr.bf16.mxu0 0
        %324 = vmatpush1.bf16.msra.mxu0 %v321
        %325 = vmatprep.subr.bf16.mxu0 0
        %326 = vmatpush1.bf16.msra.mxu0 0
        %327 = vmatprep.subr.bf16.mxu0 0
        %328 = vmatpush1.bf16.msra.mxu0 0
        %329 = vmatprep.subr.bf16.mxu0 0
        %330 = vmatpush1.bf16.msra.mxu0 0
        %331 = vmatprep.subr.bf16.mxu0 0
        %332 = vmatpush1.bf16.msra.mxu0 0
        %333 = vmatprep.subr.bf16.mxu0 0
        %334 = vmatpush1.bf16.msra.mxu0 0
        %335 = vmatprep.subr.bf16.mxu0 0
        %336 = vmatpush1.bf16.msra.mxu0 0
        %337 = vmatprep.subr.bf16.mxu0 0
        %338 = vmatpush1.bf16.msra.mxu0 0
        %339 = vmatprep.subr.bf16.mxu0 0
        %340 = vmatpush1.bf16.msra.mxu0 0
        %341 = vmatprep.subr.bf16.mxu0 0
        %342 = vmatpush1.bf16.msra.mxu0 0
        %343 = vmatprep.subr.bf16.mxu0 0
        %344 = vmatpush1.bf16.msra.mxu0 0
        %345 = vmatprep.subr.bf16.mxu0 0
        %346 = vmatpush1.bf16.msra.mxu0 0
        %347 = vmatprep.subr.bf16.mxu0 0
        %348 = vmatpush1.bf16.msra.mxu0 0
        %349 = vmatprep.subr.bf16.mxu0 0
        %350 = vmatpush1.bf16.msra.mxu0 0
        %351 = vmatprep.subr.bf16.mxu0 0
        %352 = vmatpush1.bf16.msra.mxu0 0
        %353 = vmatprep.subr.bf16.mxu0 0
        %354 = vmatpush1.bf16.msra.mxu0 0
        %355 = vmatprep.mubr.bf16.mxu0 0
        %356 = vmatmul.mubr.bf16.gmra.mrb[0].mxu0 %v317
        %v357 = vpop.f32.mrb[0].mxu0
        %v358 = vadd.f32 0.0, %v357
        %v359 = vpop.f32.mrb[0].mxu0
        %v360 = vpop.f32.mrb[0].mxu0
        %v361 = vpop.f32.mrb[0].mxu0
        %362 = vdwg.mxu0
        %363 = vrot.lane.b32.xlu0 %v245, 112
        %v364 = vpop.permute.xlu0 %363
        %365 = vrot.lane.b32.xlu0 %v245, 48
        %v366 = vpop.permute.xlu0 %365
        %v368 = vsel %vm255, %v364, 0
        %v371 = vsel %vm255, %v366, 0
        %373 = vmatprep.subr.bf16.mxu0 0
        %374 = vmatpush1.bf16.xpose.msra.mxu0 %v371
        %375 = vmatprep.subr.bf16.mxu0 0
        %376 = vmatpush1.bf16.xpose.msra.mxu0 0
        %377 = vmatprep.subr.bf16.mxu0 0
        %378 = vmatpush1.bf16.xpose.msra.mxu0 0
        %379 = vmatprep.subr.bf16.mxu0 0
        %380 = vmatpush1.bf16.xpose.msra.mxu0 0
        %381 = vmatprep.subr.bf16.mxu0 0
        %382 = vmatpush1.bf16.xpose.msra.mxu0 0
        %383 = vmatprep.subr.bf16.mxu0 0
        %384 = vmatpush1.bf16.xpose.msra.mxu0 0
        %385 = vmatprep.subr.bf16.mxu0 0
        %386 = vmatpush1.bf16.xpose.msra.mxu0 0
        %387 = vmatprep.subr.bf16.mxu0 0
        %388 = vmatpush1.bf16.xpose.msra.mxu0 0
        %389 = vmatprep.subr.bf16.mxu0 0
        %390 = vmatpush1.bf16.xpose.msra.mxu0 0
        %391 = vmatprep.subr.bf16.mxu0 0
        %392 = vmatpush1.bf16.xpose.msra.mxu0 0
        %393 = vmatprep.subr.bf16.mxu0 0
        %394 = vmatpush1.bf16.xpose.msra.mxu0 0
        %395 = vmatprep.subr.bf16.mxu0 0
        %396 = vmatpush1.bf16.xpose.msra.mxu0 0
        %397 = vmatprep.subr.bf16.mxu0 0
        %398 = vmatpush1.bf16.xpose.msra.mxu0 0
        %399 = vmatprep.subr.bf16.mxu0 0
        %400 = vmatpush1.bf16.xpose.msra.mxu0 0
        %401 = vmatprep.subr.bf16.mxu0 0
        %402 = vmatpush1.bf16.xpose.msra.mxu0 0
        %403 = vmatprep.subr.bf16.mxu0 0
        %404 = vmatpush1.bf16.xpose.msra.mxu0 0
        %405 = vmatprep.mubr.bf16.mxu0 0
        %406 = vmatmul.mubr.bf16.gmra.mrb[0].mxu0 %v368
        %v407 = vpop.f32.mrb[0].mxu0
        %v408 = vadd.f32 0.0, %v407
        %v409 = vpop.f32.mrb[0].mxu0
        %v410 = vpop.f32.mrb[0].mxu0
        %v411 = vpop.f32.mrb[0].mxu0
        %412 = vdwg.mxu0
        %v413 = vsel %vm251, -1e+30, %v408
        %v414 = vsel %vm303, %v413, -inf
        %415 = vmax.xlane.f32.xlu0 %v414
        %v416 = vpop.xlane.xlu0 %415
        %v417 = vsub.f32 %v413, %v416
        %v418 = vmul.f32 %v417, 1.442695
        %v419 = vpow.pop %v418
        %v420 = vsel %vm303, %v419, 0.0
        %421 = vadd.xlane.f32.xlu0 %v420
        %v422 = vpop.xlane.xlu0 %421
        %v423 = vrcp.pop %v422
        %v424 = vmul.f32 %v419, %v423
        %v425 = vpack.c.bf16 %v424, %v424
        %427 = vrot.lane.b32.xlu0 %v246, 112
        %v428 = vpop.permute.xlu0 %427
        %v430 = vsel %vm303, %v425, 0
        %v433 = vsel %vm319, %v428, 0
        %435 = vmatprep.subr.bf16.mxu0 0
        %436 = vmatpush1.bf16.msra.mxu0 %v433
        %437 = vmatprep.subr.bf16.mxu0 0
        %438 = vmatpush1.bf16.msra.mxu0 0
        %439 = vmatprep.subr.bf16.mxu0 0
        %440 = vmatpush1.bf16.msra.mxu0 0
        %441 = vmatprep.subr.bf16.mxu0 0
        %442 = vmatpush1.bf16.msra.mxu0 0
        %443 = vmatprep.subr.bf16.mxu0 0
        %444 = vmatpush1.bf16.msra.mxu0 0
        %445 = vmatprep.subr.bf16.mxu0 0
        %446 = vmatpush1.bf16.msra.mxu0 0
        %447 = vmatprep.subr.bf16.mxu0 0
        %448 = vmatpush1.bf16.msra.mxu0 0
        %449 = vmatprep.subr.bf16.mxu0 0
        %450 = vmatpush1.bf16.msra.mxu0 0
        %451 = vmatprep.subr.bf16.mxu0 0
        %452 = vmatpush1.bf16.msra.mxu0 0
        %453 = vmatprep.subr.bf16.mxu0 0
        %454 = vmatpush1.bf16.msra.mxu0 0
        %455 = vmatprep.subr.bf16.mxu0 0
        %456 = vmatpush1.bf16.msra.mxu0 0
        %457 = vmatprep.subr.bf16.mxu0 0
        %458 = vmatpush1.bf16.msra.mxu0 0
        %459 = vmatprep.subr.bf16.mxu0 0
        %460 = vmatpush1.bf16.msra.mxu0 0
        %461 = vmatprep.subr.bf16.mxu0 0
        %462 = vmatpush1.bf16.msra.mxu0 0
        %463 = vmatprep.subr.bf16.mxu0 0
        %464 = vmatpush1.bf16.msra.mxu0 0
        %465 = vmatprep.subr.bf16.mxu0 0
        %466 = vmatpush1.bf16.msra.mxu0 0
        %467 = vmatprep.mubr.bf16.mxu0 0
        %468 = vmatmul.mubr.bf16.gmra.mrb[0].mxu0 %v430
        %v469 = vpop.f32.mrb[0].mxu0
        %v470 = vadd.f32 0.0, %v469
        %v471 = vpop.f32.mrb[0].mxu0
        %v472 = vpop.f32.mrb[0].mxu0
        %v473 = vpop.f32.mrb[0].mxu0
        %474 = vdwg.mxu0
        %475 = vrot.lane.b32.xlu0 %v245, 96
        %v476 = vpop.permute.xlu0 %475
        %477 = vrot.lane.b32.xlu0 %v245, 32
        %v478 = vpop.permute.xlu0 %477
        %v480 = vsel %vm255, %v476, 0
        %v483 = vsel %vm255, %v478, 0
        %485 = vmatprep.subr.bf16.mxu0 0
        %486 = vmatpush1.bf16.xpose.msra.mxu0 %v483
        %487 = vmatprep.subr.bf16.mxu0 0
        %488 = vmatpush1.bf16.xpose.msra.mxu0 0
        %489 = vmatprep.subr.bf16.mxu0 0
        %490 = vmatpush1.bf16.xpose.msra.mxu0 0
        %491 = vmatprep.subr.bf16.mxu0 0
        %492 = vmatpush1.bf16.xpose.msra.mxu0 0
        %493 = vmatprep.subr.bf16.mxu0 0
        %494 = vmatpush1.bf16.xpose.msra.mxu0 0
        %495 = vmatprep.subr.bf16.mxu0 0
        %496 = vmatpush1.bf16.xpose.msra.mxu0 0
        %497 = vmatprep.subr.bf16.mxu0 0
        %498 = vmatpush1.bf16.xpose.msra.mxu0 0
        %499 = vmatprep.subr.bf16.mxu0 0
        %500 = vmatpush1.bf16.xpose.msra.mxu0 0
        %501 = vmatprep.subr.bf16.mxu0 0
        %502 = vmatpush1.bf16.xpose.msra.mxu0 0
        %503 = vmatprep.subr.bf16.mxu0 0
        %504 = vmatpush1.bf16.xpose.msra.mxu0 0
        %505 = vmatprep.subr.bf16.mxu0 0
        %506 = vmatpush1.bf16.xpose.msra.mxu0 0
        %507 = vmatprep.subr.bf16.mxu0 0
        %508 = vmatpush1.bf16.xpose.msra.mxu0 0
        %509 = vmatprep.subr.bf16.mxu0 0
        %510 = vmatpush1.bf16.xpose.msra.mxu0 0
        %511 = vmatprep.subr.bf16.mxu0 0
        %512 = vmatpush1.bf16.xpose.msra.mxu0 0
        %513 = vmatprep.subr.bf16.mxu0 0
        %514 = vmatpush1.bf16.xpose.msra.mxu0 0
        %515 = vmatprep.subr.bf16.mxu0 0
        %516 = vmatpush1.bf16.xpose.msra.mxu0 0
        %517 = vmatprep.mubr.bf16.mxu0 0
        %518 = vmatmul.mubr.bf16.gmra.mrb[0].mxu0 %v480
        %v519 = vpop.f32.mrb[0].mxu0
        %v520 = vadd.f32 0.0, %v519
        %v521 = vpop.f32.mrb[0].mxu0
        %v522 = vpop.f32.mrb[0].mxu0
        %v523 = vpop.f32.mrb[0].mxu0
        %524 = vdwg.mxu0
        %v525 = vsel %vm251, -1e+30, %v520
        %v526 = vsel %vm303, %v525, -inf
        %527 = vmax.xlane.f32.xlu0 %v526
        %v528 = vpop.xlane.xlu0 %527
        %v529 = vsub.f32 %v525, %v528
        %v530 = vmul.f32 %v529, 1.442695
        %v531 = vpow.pop %v530
        %v532 = vsel %vm303, %v531, 0.0
        %533 = vadd.xlane.f32.xlu0 %v532
        %v534 = vpop.xlane.xlu0 %533
        %v535 = vrcp.pop %v534
        %v536 = vmul.f32 %v531, %v535
        %v537 = vpack.c.bf16 %v536, %v536
        %538 = vrot.lane.b32.xlu0 %v246, 96
        %v539 = vpop.permute.xlu0 %538
        %v541 = vsel %vm303, %v537, 0
        %v544 = vsel %vm319, %v539, 0
        %546 = vmatprep.subr.bf16.mxu0 0
        %547 = vmatpush1.bf16.msra.mxu0 %v544
        %548 = vmatprep.subr.bf16.mxu0 0
        %549 = vmatpush1.bf16.msra.mxu0 0
        %550 = vmatprep.subr.bf16.mxu0 0
        %551 = vmatpush1.bf16.msra.mxu0 0
        %552 = vmatprep.subr.bf16.mxu0 0
        %553 = vmatpush1.bf16.msra.mxu0 0
        %554 = vmatprep.subr.bf16.mxu0 0
        %555 = vmatpush1.bf16.msra.mxu0 0
        %556 = vmatprep.subr.bf16.mxu0 0
        %557 = vmatpush1.bf16.msra.mxu0 0
        %558 = vmatprep.subr.bf16.mxu0 0
        %559 = vmatpush1.bf16.msra.mxu0 0
        %560 = vmatprep.subr.bf16.mxu0 0
        %561 = vmatpush1.bf16.msra.mxu0 0
        %562 = vmatprep.subr.bf16.mxu0 0
        %563 = vmatpush1.bf16.msra.mxu0 0
        %564 = vmatprep.subr.bf16.mxu0 0
        %565 = vmatpush1.bf16.msra.mxu0 0
        %566 = vmatprep.subr.bf16.mxu0 0
        %567 = vmatpush1.bf16.msra.mxu0 0
        %568 = vmatprep.subr.bf16.mxu0 0
        %569 = vmatpush1.bf16.msra.mxu0 0
        %570 = vmatprep.subr.bf16.mxu0 0
        %571 = vmatpush1.bf16.msra.mxu0 0
        %572 = vmatprep.subr.bf16.mxu0 0
        %573 = vmatpush1.bf16.msra.mxu0 0
        %574 = vmatprep.subr.bf16.mxu0 0
        %575 = vmatpush1.bf16.msra.mxu0 0
        %576 = vmatprep.subr.bf16.mxu0 0
        %577 = vmatpush1.bf16.msra.mxu0 0
        %578 = vmatprep.mubr.bf16.mxu0 0
        %579 = vmatmul.mubr.bf16.gmra.mrb[0].mxu0 %v541
        %v580 = vpop.f32.mrb[0].mxu0
        %v581 = vadd.f32 0.0, %v580
        %v582 = vpop.f32.mrb[0].mxu0
        %v583 = vpop.f32.mrb[0].mxu0
        %v584 = vpop.f32.mrb[0].mxu0
        %585 = vdwg.mxu0
        %586 = vrot.lane.b32.xlu0 %v245, 80
        %v587 = vpop.permute.xlu0 %586
        %588 = vrot.lane.b32.xlu0 %v245, 16
        %v589 = vpop.permute.xlu0 %588
        %v591 = vsel %vm255, %v587, 0
        %v594 = vsel %vm255, %v589, 0
        %596 = vmatprep.subr.bf16.mxu0 0
        %597 = vmatpush1.bf16.xpose.msra.mxu0 %v594
        %598 = vmatprep.subr.bf16.mxu0 0
        %599 = vmatpush1.bf16.xpose.msra.mxu0 0
        %600 = vmatprep.subr.bf16.mxu0 0
        %601 = vmatpush1.bf16.xpose.msra.mxu0 0
        %602 = vmatprep.subr.bf16.mxu0 0
        %603 = vmatpush1.bf16.xpose.msra.mxu0 0
        %604 = vmatprep.subr.bf16.mxu0 0
        %605 = vmatpush1.bf16.xpose.msra.mxu0 0
        %606 = vmatprep.subr.bf16.mxu0 0
        %607 = vmatpush1.bf16.xpose.msra.mxu0 0
        %608 = vmatprep.subr.bf16.mxu0 0
        %609 = vmatpush1.bf16.xpose.msra.mxu0 0
        %610 = vmatprep.subr.bf16.mxu0 0
        %611 = vmatpush1.bf16.xpose.msra.mxu0 0
        %612 = vmatprep.subr.bf16.mxu0 0
        %613 = vmatpush1.bf16.xpose.msra.mxu0 0
        %614 = vmatprep.subr.bf16.mxu0 0
        %615 = vmatpush1.bf16.xpose.msra.mxu0 0
        %616 = vmatprep.subr.bf16.mxu0 0
        %617 = vmatpush1.bf16.xpose.msra.mxu0 0
        %618 = vmatprep.subr.bf16.mxu0 0
        %619 = vmatpush1.bf16.xpose.msra.mxu0 0
        %620 = vmatprep.subr.bf16.mxu0 0
        %621 = vmatpush1.bf16.xpose.msra.mxu0 0
        %622 = vmatprep.subr.bf16.mxu0 0
        %623 = vmatpush1.bf16.xpose.msra.mxu0 0
        %624 = vmatprep.subr.bf16.mxu0 0
        %625 = vmatpush1.bf16.xpose.msra.mxu0 0
        %626 = vmatprep.subr.bf16.mxu0 0
        %627 = vmatpush1.bf16.xpose.msra.mxu0 0
        %628 = vmatprep.mubr.bf16.mxu0 0
        %629 = vmatmul.mubr.bf16.gmra.mrb[0].mxu0 %v591
        %v630 = vpop.f32.mrb[0].mxu0
        %v631 = vadd.f32 0.0, %v630
        %v632 = vpop.f32.mrb[0].mxu0
        %v633 = vpop.f32.mrb[0].mxu0
        %v634 = vpop.f32.mrb[0].mxu0
        %635 = vdwg.mxu0
        %v636 = vsel %vm251, -1e+30, %v631
        %v637 = vsel %vm303, %v636, -inf
        %638 = vmax.xlane.f32.xlu0 %v637
        %v639 = vpop.xlane.xlu0 %638
        %v640 = vsub.f32 %v636, %v639
        %v641 = vmul.f32 %v640, 1.442695
        %v642 = vpow.pop %v641
        %v643 = vsel %vm303, %v642, 0.0
        %644 = vadd.xlane.f32.xlu0 %v643
        %v645 = vpop.xlane.xlu0 %644
        %v646 = vrcp.pop %v645
        %v647 = vmul.f32 %v642, %v646
        %v648 = vpack.c.bf16 %v647, %v647
        %649 = vrot.lane.b32.xlu0 %v246, 80
        %v650 = vpop.permute.xlu0 %649
        %v652 = vsel %vm303, %v648, 0
        %v655 = vsel %vm319, %v650, 0
        %657 = vmatprep.subr.bf16.mxu0 0
        %658 = vmatpush1.bf16.msra.mxu0 %v655
        %659 = vmatprep.subr.bf16.mxu0 0
        %660 = vmatpush1.bf16.msra.mxu0 0
        %661 = vmatprep.subr.bf16.mxu0 0
        %662 = vmatpush1.bf16.msra.mxu0 0
        %663 = vmatprep.subr.bf16.mxu0 0
        %664 = vmatpush1.bf16.msra.mxu0 0
        %665 = vmatprep.subr.bf16.mxu0 0
        %666 = vmatpush1.bf16.msra.mxu0 0
        %667 = vmatprep.subr.bf16.mxu0 0
        %668 = vmatpush1.bf16.msra.mxu0 0
        %669 = vmatprep.subr.bf16.mxu0 0
        %670 = vmatpush1.bf16.msra.mxu0 0
        %671 = vmatprep.subr.bf16.mxu0 0
        %672 = vmatpush1.bf16.msra.mxu0 0
        %673 = vmatprep.subr.bf16.mxu0 0
        %674 = vmatpush1.bf16.msra.mxu0 0
        %675 = vmatprep.subr.bf16.mxu0 0
        %676 = vmatpush1.bf16.msra.mxu0 0
        %677 = vmatprep.subr.bf16.mxu0 0
        %678 = vmatpush1.bf16.msra.mxu0 0
        %679 = vmatprep.subr.bf16.mxu0 0
        %680 = vmatpush1.bf16.msra.mxu0 0
        %681 = vmatprep.subr.bf16.mxu0 0
        %682 = vmatpush1.bf16.msra.mxu0 0
        %683 = vmatprep.subr.bf16.mxu0 0
        %684 = vmatpush1.bf16.msra.mxu0 0
        %685 = vmatprep.subr.bf16.mxu0 0
        %686 = vmatpush1.bf16.msra.mxu0 0
        %687 = vmatprep.subr.bf16.mxu0 0
        %688 = vmatpush1.bf16.msra.mxu0 0
        %689 = vmatprep.mubr.bf16.mxu0 0
        %690 = vmatmul.mubr.bf16.gmra.mrb[0].mxu0 %v652
        %v691 = vpop.f32.mrb[0].mxu0
        %v692 = vadd.f32 0.0, %v691
        %v693 = vpop.f32.mrb[0].mxu0
        %v694 = vpop.f32.mrb[0].mxu0
        %v695 = vpop.f32.mrb[0].mxu0
        %696 = vdwg.mxu0
        %698 = vrot.lane.b32.xlu0 %v470, 16
        %v699 = vpop.permute.xlu0 %698
        %702 = vrot.lane.b32.xlu0 %v581, 32
        %v703 = vpop.permute.xlu0 %702
        %706 = vrot.lane.b32.xlu0 %v692, 48
        %v707 = vpop.permute.xlu0 %706
        %v709 = vsel %vm255, %v358, %v699
        %v710 = vsel %vm200, %v709, %v703
        %vm711 = vcmask 392192
        %v712 = vsel %vm711, %v710, %v707
        %vm713 = vcmask 523264
        %714 = vst.msk [vmem:[%s173] sm:$0xff] %vm713, %v712
        %s715 = sand.u32 %s75, 1
        %s716 = scalar_lea.sflag [#allocation4], %s715
        %s717 = sand.u32 %s75, 1
        %s718 = smul.addr %s717, 8
        %s719 = scalar_lea.vmem [#allocation7], %s718
        // Predicated region
        $region37: #{tpu_custom_call.1} parent=27 // pred_check
          %p720 = pneg %p85
        $region38: #{tpu_custom_call.1} parent=27 // pred_check_branch
          %722 = sbr.rel (%p720) target = $region40
        $region39: #{tpu_custom_call.1} parent=27 // pred_region
          %s724 = ssub.s32 128, 128
          %725 = vsyncadd %s716, %s724
          %s726 = smul.addr %s20, 128
          %s727 = scalar_lea.hbm %s2, %s726
          %s729 = sshll.u32 %s719, 4
          %s730 = int_to_ptr.vmem [resolvable:$true] %s729
          %732 = dma.vmem_to_hbm [thread:$0]  %s730, 128, %s727, %s716
        $region40: #{tpu_custom_call.1} parent=27 // pred_fallthru
          _
      $region28: #{tpu_custom_call.1} parent=5 // pred_fallthru
        _
      %p733 = scmp.le.s32.totalorder 2, %s15
      // Predicated region
      $region41: #{tpu_custom_call.1} parent=5 // pred_check
        %p734 = pneg %p733
      $region42: #{tpu_custom_call.1} parent=5 // pred_check_branch
        %736 = sbr.rel (%p734) target = $region44
      $region43: #{tpu_custom_call.1} parent=5 // pred_region
        %s737 = ssub.s32 %s15, 2
        // Predicated region
        $region45: #{tpu_custom_call.1} parent=43 // pred_check
          %p738 = pneg %p91
        $region46: #{tpu_custom_call.1} parent=43 // pred_check_branch
          %740 = sbr.rel (%p738) target = $region48
        $region47: #{tpu_custom_call.1} parent=43 // pred_region
          %s741 = sand.u32 %s76, 1
          %s742 = scalar_lea.sflag [#allocation4], %s741
          %s743 = sand.u32 %s76, 1
          %s744 = smul.addr %s743, 8
          %s745 = scalar_lea.vmem [#allocation7], %s744
          %746 = dma.done %s742, 128
        $region48: #{tpu_custom_call.1} parent=43 // pred_fallthru
          _
      $region44: #{tpu_custom_call.1} parent=5 // pred_fallthru
        _
    $region6: #{tpu_custom_call.1} parent=1 // loop_footer
      %s19 = sadd.s32 1, %s15
    $region7: #{tpu_custom_call.1} parent=1 // loop_footer_branch
      %14 = sbr.rel target = $region3
    $region8: #{tpu_custom_call.1} parent=1 // loop_exit
      _
    %747 = vsyncpa [#allocation3], 1
    %s748 = scalar_lea.sflag [#allocation3], 1
    %749 = vsyncpa %s748, 1
    %750 = vsyncpa [#allocation6], 1
    %751 = vsyncpa [#allocation4], 1
    %s752 = scalar_lea.sflag [#allocation4], 1
    %753 = vsyncpa %s752, 1

</llo_original>
